<compile_context>
chip_gen: v5e
topology: v5e:2x2
jax: 0.10.0
libtpu: 0.0.40
codegen_flags: <defaults>
</compile_context>

<pallas_src>
import functools

import jax
import jax.numpy as jnp
from jax.experimental import pallas as pl
from jax.experimental.pallas import tpu as pltpu


_SQRT_2_OVER_PI = 0.7978845608028654
_GELU_A = 0.044715


def _gelu_tanh(x):
    # nn.GELU(approximate='tanh'); Horner form of the cubic: x + a*x^3 = x * (1 + a*x*x).
    dt = x.dtype
    c = jnp.asarray(_SQRT_2_OVER_PI, dt)
    a = jnp.asarray(_GELU_A, dt)
    inner = c * x * (1.0 + a * x * x)
    return 0.5 * x * (1.0 + jnp.tanh(inner))


def mlp_resident_kernel(x_ref, w1_ref, b1_ref, w2_ref, b2_ref, o_ref, *, act_dtype):
    # Weights are VMEM-resident (constant index maps -> fetched once across the whole grid).
    # x_ref: (tm, D), w1_ref: (D, Di), b1_ref: (1, Di), w2_ref: (Di, D), b2_ref: (1, D)
    h = jnp.dot(x_ref[...], w1_ref[...], preferred_element_type=jnp.float32)
    h = h.astype(act_dtype) + b1_ref[...].astype(act_dtype)
    h = _gelu_tanh(h)                              # drop1: Identity (drop_rate == 0)
    y = jnp.dot(h.astype(w2_ref.dtype), w2_ref[...], preferred_element_type=jnp.float32)
    o_ref[...] = (y + b2_ref[...].astype(jnp.float32)).astype(o_ref.dtype)  # drop2: Identity


def mlp_stream_kernel(x_ref, w1_ref, b1_ref, w2_ref, b2_ref, o_ref, acc_ref, *, act_dtype):
    # Hidden dim Di streamed in tk-wide blocks over the "arbitrary" k grid axis.
    # x_ref: (tm, D), w1_ref: (D, tk), b1_ref: (1, tk), w2_ref: (tk, D), b2_ref: (1, D)
    # acc_ref: (tm, D) f32 scratch, persists across k.
    k = pl.program_id(1)
    nk = pl.num_programs(1)

    @pl.when(k == 0)
    def _():
        acc_ref[...] = jnp.zeros_like(acc_ref)

    h = jnp.dot(x_ref[...], w1_ref[...], preferred_element_type=jnp.float32)
    h = h.astype(act_dtype) + b1_ref[...].astype(act_dtype)
    h = _gelu_tanh(h)                              # drop1: Identity
    part = jnp.dot(h.astype(w2_ref.dtype), w2_ref[...], preferred_element_type=jnp.float32)

    @pl.when(k < nk - 1)
    def _():
        acc_ref[...] += part

    @pl.when(k == nk - 1)
    def _():
        # Fused finalize: skip the accumulator RMW on the last step.
        o_ref[...] = (acc_ref[...] + part
                      + b2_ref[...].astype(jnp.float32)).astype(o_ref.dtype)  # drop2: Identity


def _round_up(x, m):
    return ((x + m - 1) // m) * m


def _vmem_limit_bytes():
    """Generation-aware VMEM limit: ~100 MiB on v5e/v6e (128 MiB), ~48 MiB on v7x (64 MiB)."""
    cap = None
    try:
        info = pltpu.get_tpu_info()
        cap = getattr(info, "vmem_capacity_bytes", None)
    except Exception:
        cap = None
    if not cap or cap <= 0:
        cap = 64 * 1024 * 1024   # conservative (v7x per-TensorCore) fallback
    return int(min(cap - 16 * 1024 * 1024, (cap * 25) // 32))


def _pick_tk(di, tk_req):
    """Largest multiple of 128 that divides Di and is <= tk_req, else full Di."""
    if di <= tk_req:
        return di
    tk = (tk_req // 128) * 128
    while tk >= 128:
        if di % tk == 0:
            return tk
        tk -= 128
    return di


@functools.partial(jax.jit, static_argnames=("tm", "tk"))
def mlp_pallas(x, w1, b1, w2, b2, *, tm=None, tk=512):
    """x: (N, D); w1: (D, Di); b1: (Di,); w2: (Di, D); b2: (D,)."""
    N, D = x.shape
    Di = w1.shape[1]

    x_item = jnp.dtype(x.dtype).itemsize
    w_item = jnp.dtype(w1.dtype).itemsize
    # GELU / bias math in bf16 on bf16 activations (v6e/v7x fast path), f32 otherwise (v5e).
    act_dtype = jnp.bfloat16 if x.dtype == jnp.bfloat16 else jnp.float32
    act_item = jnp.dtype(act_dtype).itemsize

    # Row alignment: 8 rows for 4-byte dtypes, 16 for bf16, 32 for int8/fp8.
    row_align = max(8, 32 // x_item)

    # Token tile: large enough to push arithmetic intensity past the HBM crossover.
    if tm is None:
        tm = 1024 if (D <= 2048 and N >= 2048) else 512
    tm = max(row_align, (tm // row_align) * row_align)
    tm = min(tm, _round_up(N, row_align))

    vmem_limit = _vmem_limit_bytes()
    budget = (vmem_limit * 4) // 5   # ~20% headroom for compiler-internal scratch

    b1_2d = b1.reshape(1, Di)
    b2_2d = b2.reshape(1, D)

    def io_tiles_bytes(tm_):
        # double-buffered x tile + double-buffered output tile
        return 2 * tm_ * D * x_item + 2 * tm_ * D * x_item

    def resident_bytes(tm_):
        w_bytes = (D * Di + Di * D + Di + D) * w_item
        return io_tiles_bytes(tm_) + 2 * w_bytes + 2 * tm_ * Di * max(act_item, 4)

    def stream_bytes(tm_, tk_):
        w_bytes = (D * tk_ + tk_ * D + tk_ + D) * w_item
        return (io_tiles_bytes(tm_) + 2 * w_bytes
                + tm_ * D * 4                        # f32 accumulator scratch
                + 2 * tm_ * tk_ * max(act_item, 4))  # (tm, tk) intermediates

    flops = 2 * 2 * N * D * Di       # two matmuls
    trans = N * Di                   # tanh in GELU

    if resident_bytes(tm) <= budget:
        # ---------------- RESIDENT-WEIGHTS PATH ----------------
        num_i = -(-N // tm)
        cost = pl.CostEstimate(
            flops=flops, transcendentals=trans,
            bytes_accessed=2 * N * D * x_item
            + (w1.size + w2.size + b1.size + b2.size) * w_item,
        )
        kernel = functools.partial(mlp_resident_kernel, act_dtype=act_dtype)
        return pl.pallas_call(
            kernel,
            out_shape=jax.ShapeDtypeStruct((N, D), x.dtype),
            grid_spec=pltpu.PrefetchScalarGridSpec(
                num_scalar_prefetch=0,
                grid=(num_i,),
                in_specs=[
                    pl.BlockSpec((tm, D), lambda i: (i, 0)),    # x tile
                    pl.BlockSpec((D, Di), lambda i: (0, 0)),    # W1 (resident)
                    pl.BlockSpec((1, Di), lambda i: (0, 0)),    # b1 (resident)
                    pl.BlockSpec((Di, D), lambda i: (0, 0)),    # W2 (resident)
                    pl.BlockSpec((1, D), lambda i: (0, 0)),     # b2 (resident)
                ],
                out_specs=pl.BlockSpec((tm, D), lambda i: (i, 0)),
            ),
            compiler_params=pltpu.CompilerParams(
                dimension_semantics=("parallel",),
                vmem_limit_bytes=vmem_limit,
            ),
            cost_estimate=cost,
        )(x, w1, b1_2d, w2, b2_2d)

    # ---------------- STREAMED-HIDDEN-DIM PATH ----------------
    tk_sel = _pick_tk(Di, tk)
    # Shrink tiles until the footprint fits the budget (tm first, then tk).
    while stream_bytes(tm, tk_sel) > budget and tm > max(256, row_align):
        tm = max(row_align, ((tm // 2) // row_align) * row_align)
    while stream_bytes(tm, tk_sel) > budget and tk_sel > 128:
        smaller = _pick_tk(Di, tk_sel - 128)
        if smaller >= tk_sel:
            break
        tk_sel = smaller

    num_i = -(-N // tm)
    nk = Di // tk_sel

    cost = pl.CostEstimate(
        flops=flops, transcendentals=trans,
        bytes_accessed=2 * N * D * x_item
        + (w1.size + w2.size) * w_item * num_i
        + (b1.size + b2.size) * w_item,
    )
    kernel = functools.partial(mlp_stream_kernel, act_dtype=act_dtype)
    return pl.pallas_call(
        kernel,
        out_shape=jax.ShapeDtypeStruct((N, D), x.dtype),
        grid_spec=pltpu.PrefetchScalarGridSpec(
            num_scalar_prefetch=0,
            grid=(num_i, nk),
            in_specs=[
                pl.BlockSpec((tm, D), lambda i, k: (i, 0)),       # x tile (not re-fetched over k)
                pl.BlockSpec((D, tk_sel), lambda i, k: (0, k)),   # W1 column block (streamed)
                pl.BlockSpec((1, tk_sel), lambda i, k: (0, k)),   # b1 block
                pl.BlockSpec((tk_sel, D), lambda i, k: (k, 0)),   # W2 row block (streamed)
                pl.BlockSpec((1, D), lambda i, k: (0, 0)),        # b2
            ],
            out_specs=pl.BlockSpec((tm, D), lambda i, k: (i, 0)),
            scratch_shapes=[pltpu.VMEM((tm, D), jnp.float32)],
        ),
        compiler_params=pltpu.CompilerParams(
            dimension_semantics=("parallel", "arbitrary"),
            vmem_limit_bytes=vmem_limit,
        ),
        cost_estimate=cost,
    )(x, w1, b1_2d, w2, b2_2d)


def init_mlp_params(key, dim, dim_inner=None, init_std=0.02, dtype=jnp.float32):
    """Matches Mlp.init_weights: normal(0, 0.02) weights, zero biases."""
    dim_inner = dim * 4 if dim_inner is None else dim_inner
    k1, k2 = jax.random.split(key)
    # PyTorch nn.Linear weights are [out, in]; store transposed [in, out] for the kernel.
    w_fc = (jax.random.normal(k1, (dim_inner, dim), dtype=jnp.float32) * init_std).T
    b_fc = jnp.zeros((dim_inner,), dtype=jnp.float32)
    w_proj = (jax.random.normal(k2, (dim, dim_inner), dtype=jnp.float32) * init_std).T
    b_proj = jnp.zeros((dim,), dtype=jnp.float32)
    return (w_fc.astype(dtype), b_fc.astype(dtype),
            w_proj.astype(dtype), b_proj.astype(dtype))


if __name__ == "__main__":
    # Small shapes: batch=2, seq=8, dim=32 -> dim_inner = 4*dim = 128
    B, S, D = 2, 8, 32
    key = jax.random.PRNGKey(0)
    kx, kp = jax.random.split(key)

    x = jax.random.normal(kx, (B, S, D), dtype=jnp.float32)
    w1, b1, w2, b2 = init_mlp_params(kp, D)

    # Flatten tokens for the kernel, reshape back afterwards.
    x_flat = x.reshape(B * S, D)
    y_flat = mlp_pallas(x_flat, w1, b1, w2, b2)
    y = y_flat.reshape(B, S, D)
    jax.block_until_ready(y)

    # Pure-JAX reference for sanity check.
    h_ref = x_flat @ w1 + b1
    h_ref = 0.5 * h_ref * (1.0 + jnp.tanh(jnp.sqrt(2.0 / jnp.pi)
                                          * (h_ref + 0.044715 * h_ref ** 3)))
    y_ref = (h_ref @ w2 + b2).reshape(B, S, D)
    assert jnp.allclose(y, y_ref, atol=1e-5, rtol=1e-5), "mismatch vs reference"

    print("KERNEL_OK")
</pallas_src>

<mosaic_0001>
module attributes {stable_mosaic.version = 11 : i64} {
  func.func @mlp_resident_kernel(%arg0: i32, %arg1: memref<16x32xf32, #tpu.memory_space<vmem>>, %arg2: memref<32x128xf32, #tpu.memory_space<vmem>>, %arg3: memref<1x128xf32, #tpu.memory_space<vmem>>, %arg4: memref<128x32xf32, #tpu.memory_space<vmem>>, %arg5: memref<1x32xf32, #tpu.memory_space<vmem>>, %arg6: memref<16x32xf32, #tpu.memory_space<vmem>>) attributes {dimension_semantics = [#tpu.dimension_semantics<parallel>], iteration_bounds = array<i64: 1>, scalar_prefetch = 0 : i64, scratch_operands = 0 : i64, tpu.core_type = #tpu.core_type<tc>, window_params = [{transform_indices = @transform_0, window_bounds = array<i64: 16, 32>}, {pipeline_mode = #tpu.pipeline_mode<synchronous>, transform_indices = @transform_1, window_bounds = array<i64: 32, 128>}, {pipeline_mode = #tpu.pipeline_mode<synchronous>, transform_indices = @transform_2, window_bounds = array<i64: 1, 128>}, {pipeline_mode = #tpu.pipeline_mode<synchronous>, transform_indices = @transform_3, window_bounds = array<i64: 128, 32>}, {pipeline_mode = #tpu.pipeline_mode<synchronous>, transform_indices = @transform_4, window_bounds = array<i64: 1, 32>}, {transform_indices = @transform_5, window_bounds = array<i64: 16, 32>}]} {
    %c0 = arith.constant 0 : index
    %c0_0 = arith.constant 0 : index
    %0 = vector.load %arg1[%c0, %c0_0] : memref<16x32xf32, #tpu.memory_space<vmem>>, vector<16x32xf32>
    %c0_1 = arith.constant 0 : index
    %c0_2 = arith.constant 0 : index
    %1 = vector.load %arg2[%c0_1, %c0_2] : memref<32x128xf32, #tpu.memory_space<vmem>>, vector<32x128xf32>
    %cst = arith.constant dense<0.000000e+00> : vector<16x128xf32>
    %2 = tpu.matmul %0, %1, %cst {dimension_numbers = #tpu.dot_dimension_numbers<[1], [0], [0], [1], [0, 0, 1, 1], [], []>} : vector<16x32xf32>, vector<32x128xf32>, vector<16x128xf32> -> vector<16x128xf32>
    %c0_3 = arith.constant 0 : index
    %c0_4 = arith.constant 0 : index
    %3 = vector.load %arg3[%c0_3, %c0_4] : memref<1x128xf32, #tpu.memory_space<vmem>>, vector<1x128xf32>
    %4 = vector.broadcast %3 : vector<1x128xf32> to vector<16x128xf32>
    %5 = arith.addf %2, %4 : vector<16x128xf32>
    %cst_5 = arith.constant 0.797884583 : f32
    %6 = vector.broadcast %cst_5 : f32 to vector<16x128xf32>
    %7 = arith.mulf %6, %5 : vector<16x128xf32>
    %cst_6 = arith.constant 4.471500e-02 : f32
    %8 = vector.broadcast %cst_6 : f32 to vector<16x128xf32>
    %9 = arith.mulf %8, %5 : vector<16x128xf32>
    %10 = arith.mulf %9, %5 : vector<16x128xf32>
    %cst_7 = arith.constant 1.000000e+00 : f32
    %11 = vector.broadcast %cst_7 : f32 to vector<16x128xf32>
    %12 = arith.addf %11, %10 : vector<16x128xf32>
    %13 = arith.mulf %7, %12 : vector<16x128xf32>
    %cst_8 = arith.constant 5.000000e-01 : f32
    %14 = vector.broadcast %cst_8 : f32 to vector<16x128xf32>
    %15 = arith.mulf %14, %5 : vector<16x128xf32>
    %16 = math.tanh %13 : vector<16x128xf32>
    %cst_9 = arith.constant 1.000000e+00 : f32
    %17 = vector.broadcast %cst_9 : f32 to vector<16x128xf32>
    %18 = arith.addf %17, %16 : vector<16x128xf32>
    %19 = arith.mulf %15, %18 : vector<16x128xf32>
    %c0_10 = arith.constant 0 : index
    %c0_11 = arith.constant 0 : index
    %20 = vector.load %arg4[%c0_10, %c0_11] : memref<128x32xf32, #tpu.memory_space<vmem>>, vector<128x32xf32>
    %cst_12 = arith.constant dense<0.000000e+00> : vector<16x32xf32>
    %21 = tpu.matmul %19, %20, %cst_12 {dimension_numbers = #tpu.dot_dimension_numbers<[1], [0], [0], [1], [0, 0, 1, 1], [], []>} : vector<16x128xf32>, vector<128x32xf32>, vector<16x32xf32> -> vector<16x32xf32>
    %c0_13 = arith.constant 0 : index
    %c0_14 = arith.constant 0 : index
    %22 = vector.load %arg5[%c0_13, %c0_14] : memref<1x32xf32, #tpu.memory_space<vmem>>, vector<1x32xf32>
    %23 = vector.broadcast %22 : vector<1x32xf32> to vector<16x32xf32>
    %24 = arith.addf %21, %23 : vector<16x32xf32>
    %c0_15 = arith.constant 0 : index
    %c0_16 = arith.constant 0 : index
    %25 = vector.load %arg6[%c0_15, %c0_16] : memref<16x32xf32, #tpu.memory_space<vmem>>, vector<16x32xf32>
    tpu.vector_store %arg6[%c0_15, %c0_16], %24 {strides = array<i32>} : memref<16x32xf32, #tpu.memory_space<vmem>>, vector<16x32xf32>,
    return
  }
  func.func @transform_0(%arg0: i32) -> (i32, i32) {
    %c0_i32 = arith.constant 0 : i32
    %c0_i32_0 = arith.constant 0 : i32
    return %arg0, %c0_i32 : i32, i32
  }
  func.func @transform_1(%arg0: i32) -> (i32, i32) {
    %c0_i32 = arith.constant 0 : i32
    %c0_i32_0 = arith.constant 0 : i32
    %c0_i32_1 = arith.constant 0 : i32
    return %c0_i32, %c0_i32_0 : i32, i32
  }
  func.func @transform_2(%arg0: i32) -> (i32, i32) {
    %c0_i32 = arith.constant 0 : i32
    %c0_i32_0 = arith.constant 0 : i32
    %c0_i32_1 = arith.constant 0 : i32
    return %c0_i32, %c0_i32_0 : i32, i32
  }
  func.func @transform_3(%arg0: i32) -> (i32, i32) {
    %c0_i32 = arith.constant 0 : i32
    %c0_i32_0 = arith.constant 0 : i32
    %c0_i32_1 = arith.constant 0 : i32
    return %c0_i32, %c0_i32_0 : i32, i32
  }
  func.func @transform_4(%arg0: i32) -> (i32, i32) {
    %c0_i32 = arith.constant 0 : i32
    %c0_i32_0 = arith.constant 0 : i32
    %c0_i32_1 = arith.constant 0 : i32
    return %c0_i32, %c0_i32_0 : i32, i32
  }
  func.func @transform_5(%arg0: i32) -> (i32, i32) {
    %c0_i32 = arith.constant 0 : i32
    %c0_i32_0 = arith.constant 0 : i32
    return %arg0, %c0_i32 : i32, i32
  }
}

</mosaic_0001>

<llo_original>
// kernel: mlp_pallas.1
$region0: #{mlp_pallas.1}
  #allocation0 [shape = 'u32[]', space=smem, size = 0x4, offset = 0x4, fixed_abs, tag = 'smem constant byte address 0x4 - core index']
  #allocation1 [shape = 'u32[72,128]{1,0:T(1,128)}', space=vmem, size = 0x9000, scoped, tag = 'internal scratch']
  %s0 = inlined_call_operand.vmem [shape: f32[16,32], index: 0, kind: input, shape index: {}]
  %s1 = inlined_call_operand.vmem [shape: f32[32,128], index: 1, kind: input, shape index: {}]
  %s2 = inlined_call_operand.vmem [shape: f32[1,128], index: 2, kind: input, shape index: {}]
  %s3 = inlined_call_operand.vmem [shape: f32[128,32], index: 3, kind: input, shape index: {}]
  %s4 = inlined_call_operand.vmem [shape: f32[1,32], index: 4, kind: input, shape index: {}]
  %s5 = inlined_call_operand.hbm [shape: f32[16,32], index: 5, kind: output, shape index: {}]
  %s6 = sld [smem:[#allocation0]]
  $region30: #{mlp_pallas.1} parent=0
    _
  %s8 = ssub.s32 1, %s6
  %s9 = scalar_select 0, %s8, %s6
  $region1: #{mlp_pallas.1} parent=0
    #allocation2 [shape = 'u8[8192]{0}', space=vmem, size = 0x2000, scoped, tag = 'output window, operand 0, single buffered']
    #allocation3 [shape = 's32[1]{0}', space=sflag, size = 0x4, scoped, tag = 'scoped memory for mlp_pallas.1']
    %10 = vsyncpa [#allocation3], 0
    // Predicated region
    $region2: #{mlp_pallas.1} parent=1 // pred_check
      _
    $region3: #{mlp_pallas.1} parent=1 // pred_check_branch
      %12 = sbr.rel (0) target = $region5
    $region4: #{mlp_pallas.1} parent=1 // pred_region
      _
    $region5: #{mlp_pallas.1} parent=1 // pred_fallthru
      _
    // Predicated region
    $region6: #{mlp_pallas.1} parent=1 // pred_check
      _
    $region7: #{mlp_pallas.1} parent=1 // pred_check_branch
      %14 = sbr.rel (0) target = $region9
    $region8: #{mlp_pallas.1} parent=1 // pred_region
      _
    $region9: #{mlp_pallas.1} parent=1 // pred_fallthru
      _
    // Predicated region
    $region10: #{mlp_pallas.1} parent=1 // pred_check
      _
    $region11: #{mlp_pallas.1} parent=1 // pred_check_branch
      %16 = sbr.rel (0) target = $region13
    $region12: #{mlp_pallas.1} parent=1 // pred_region
      _
    $region13: #{mlp_pallas.1} parent=1 // pred_fallthru
      _
    // Predicated region
    $region14: #{mlp_pallas.1} parent=1 // pred_check
      _
    $region15: #{mlp_pallas.1} parent=1 // pred_check_branch
      %18 = sbr.rel (0) target = $region17
    $region16: #{mlp_pallas.1} parent=1 // pred_region
      _
    $region17: #{mlp_pallas.1} parent=1 // pred_fallthru
      _
    // Predicated region
    $region18: #{mlp_pallas.1} parent=1 // pred_check
      _
    $region19: #{mlp_pallas.1} parent=1 // pred_check_branch
      %20 = sbr.rel (0) target = $region21
    $region20: #{mlp_pallas.1} parent=1 // pred_region
      _
    $region21: #{mlp_pallas.1} parent=1 // pred_fallthru
      _
    %v21 = vld [vmem:[%s0] sm:$0xff]
    %v22 = vld [vmem:[%s0 + $0x8] sm:$0xff]
    %v23 = vld [vmem:[%s1] sm:$0xff]
    %v24 = vld [vmem:[%s1 + $0x8] sm:$0xff]
    %v25 = vld [vmem:[%s1 + $0x10] sm:$0xff]
    %v26 = vld [vmem:[%s1 + $0x18] sm:$0xff]
    %v27 = vld [vmem:[%s2] sm:$0x1]
    %v29 = vperm.slane %v27, 0
    %vm31 = vcmask 261120
    %v33 = vsel %vm31, %v21, 0
    %v36 = vsel %vm31, %v22, 0
    %38 = vmatpush.msra.mxu0 0.0
    %39 = vmatpush.msra.mxu0 0.0
    %40 = vmatpush.msra.mxu0 0.0
    %41 = vmatpush.msra.mxu0 0.0
    %42 = vmatpush.msra.mxu0 0.0
    %43 = vmatpush.msra.mxu0 0.0
    %44 = vmatpush.msra.mxu0 0.0
    %45 = vmatpush.msra.mxu0 0.0
    %46 = vmatpush.msra.mxu0 0.0
    %47 = vmatpush.msra.mxu0 0.0
    %48 = vmatpush.msra.mxu0 0.0
    %49 = vmatpush.msra.mxu0 0.0
    %50 = vmatpush.msra.mxu0 %v26
    %51 = vmatpush.msra.mxu0 %v25
    %52 = vmatpush.msra.mxu0 %v24
    %53 = vmatpush.msra.mxu0 %v23
    %54 = vmatmul.f32.gmra.mxu0 %v33
    %v55 = vpop.f32.mrf.mxu0
    %v56 = vadd.f32 %v29, %v55
    %57 = vmatmul.f32.gmra.mxu0 %v36
    %v58 = vpop.f32.mrf.mxu0
    %v59 = vadd.f32 %v29, %v58
    %60 = vdwg.mxu0
    %v61 = vmul.f32 %v56, 0.7978846
    %v62 = vmul.f32 %v59, 0.7978846
    %v63 = vmul.f32 %v56, 0.044715
    %v64 = vmul.f32 %v59, 0.044715
    %v65 = vmul.f32 %v63, %v56
    %v66 = vmul.f32 %v64, %v59
    %v67 = vadd.f32 %v65, 1.0
    %v68 = vadd.f32 %v66, 1.0
    %v69 = vmul.f32 %v61, %v67
    %v70 = vmul.f32 %v62, %v68
    %v71 = vmul.f32 %v56, 0.5
    %v72 = vmul.f32 %v59, 0.5
    %v73 = vtanh.pop %v69
    %v74 = vtanh.pop %v70
    %v75 = vadd.f32 %v73, 1.0
    %v76 = vadd.f32 %v74, 1.0
    %v77 = vmul.f32 %v71, %v75
    %v78 = vmul.f32 %v72, %v76
    %v79 = vld [vmem:[%s3] sm:$0xff]
    %v80 = vld [vmem:[%s3 + $0x8] sm:$0xff]
    %v81 = vld [vmem:[%s3 + $0x10] sm:$0xff]
    %v82 = vld [vmem:[%s3 + $0x18] sm:$0xff]
    %v83 = vld [vmem:[%s3 + $0x20] sm:$0xff]
    %v84 = vld [vmem:[%s3 + $0x28] sm:$0xff]
    %v85 = vld [vmem:[%s3 + $0x30] sm:$0xff]
    %v86 = vld [vmem:[%s3 + $0x38] sm:$0xff]
    %v87 = vld [vmem:[%s3 + $0x40] sm:$0xff]
    %v88 = vld [vmem:[%s3 + $0x48] sm:$0xff]
    %v89 = vld [vmem:[%s3 + $0x50] sm:$0xff]
    %v90 = vld [vmem:[%s3 + $0x58] sm:$0xff]
    %v91 = vld [vmem:[%s3 + $0x60] sm:$0xff]
    %v92 = vld [vmem:[%s3 + $0x68] sm:$0xff]
    %v93 = vld [vmem:[%s3 + $0x70] sm:$0xff]
    %v94 = vld [vmem:[%s3 + $0x78] sm:$0xff]
    %v95 = vld [vmem:[%s4] sm:$0x1]
    %v97 = vperm.slane %v95, 0
    %99 = vmatpush.msra.mxu0 %v94
    %100 = vmatpush.msra.mxu0 %v93
    %101 = vmatpush.msra.mxu0 %v92
    %102 = vmatpush.msra.mxu0 %v91
    %103 = vmatpush.msra.mxu0 %v90
    %104 = vmatpush.msra.mxu0 %v89
    %105 = vmatpush.msra.mxu0 %v88
    %106 = vmatpush.msra.mxu0 %v87
    %107 = vmatpush.msra.mxu0 %v86
    %108 = vmatpush.msra.mxu0 %v85
    %109 = vmatpush.msra.mxu0 %v84
    %110 = vmatpush.msra.mxu0 %v83
    %111 = vmatpush.msra.mxu0 %v82
    %112 = vmatpush.msra.mxu0 %v81
    %113 = vmatpush.msra.mxu0 %v80
    %114 = vmatpush.msra.mxu0 %v79
    %115 = vmatmul.f32.gmra.mxu0 %v77
    %v116 = vpop.f32.mrf.mxu0
    %v117 = vadd.f32 %v97, %v116
    %118 = vmatmul.f32.gmra.mxu0 %v78
    %v119 = vpop.f32.mrf.mxu0
    %v120 = vadd.f32 %v97, %v119
    %121 = vdwg.mxu0
    %122 = vst.msk [vmem:[#allocation2] sm:$0xff] %vm31, %v117
    %123 = vst.msk [vmem:[#allocation2 + $0x8] sm:$0xff] %vm31, %v120
    // Predicated region
    $region22: #{mlp_pallas.1} parent=1 // pred_check
      _
    $region23: #{mlp_pallas.1} parent=1 // pred_check_branch
      %125 = sbr.rel (0) target = $region25
    $region24: #{mlp_pallas.1} parent=1 // pred_region
      %127 = vsyncadd [#allocation3], 0
      %s128 = sshll.u32 [#allocation2], 4
      %s129 = int_to_ptr.vmem [resolvable:$true] %s128
      %s130 = sshll.u32 %s5, 4
      %s131 = int_to_ptr.hbm [resolvable:$true] %s130
      %136 = dma.vmem_to_hbm [thread:$0]  %s129, 256, %s131, [#allocation3], 128, 128, 8
    $region25: #{mlp_pallas.1} parent=1 // pred_fallthru
      _
    // Predicated region
    $region26: #{mlp_pallas.1} parent=1 // pred_check
      _
    $region27: #{mlp_pallas.1} parent=1 // pred_check_branch
      %138 = sbr.rel (0) target = $region29
    $region28: #{mlp_pallas.1} parent=1 // pred_region
      %140 = dma.done [#allocation3], 256
    $region29: #{mlp_pallas.1} parent=1 // pred_fallthru
      _
    %141 = vsyncpa [#allocation3], 1

</llo_original>
